<compile_context>
chip_gen: v7x
topology: tpu7x:2x2x1
jax: 0.10.0
libtpu: 0.0.40
codegen_flags: <defaults>
</compile_context>

<pallas_src>
import functools
import math

import jax
import jax.numpy as jnp
from jax.experimental import pallas as pl
from jax.experimental.pallas import tpu as pltpu


def _tts_conv_kernel(x_ref, wv_ref, wg_ref, bv_ref, bg_ref, sb_ref,
                     out_ref, xcat_scr, *, K, pad_lo):
    """One batch element: x_ref (1, C, T) -> out_ref (1, C, T)."""
    C, T = x_ref.shape[1], x_ref.shape[2]

    x2d = x_ref[0]                                   # (C, T)  conv input == residual
    # TODO(synk): nn.Dropout is modelled in eval mode (identity) — no RNG mask.

    # Build the im2col operand for the 1-D conv in VMEM:
    #   xcat[k*C + c, t] = x[c, t + k - pad_lo], zero outside [0, T).
    # Only static slices; this replaces the wrapper-side jnp.pad entirely.
    xcat_scr[...] = jnp.zeros_like(xcat_scr)
    for k in range(K):                               # K is small & static
        d = k - pad_lo
        out_lo = max(0, -d)
        out_hi = min(T, T - d)
        if out_hi > out_lo:
            xcat_scr[k * C:(k + 1) * C, out_lo:out_hi] = x2d[:, out_lo + d:out_hi + d]
    xcat = xcat_scr[...]                             # (K*C, T)

    # Conv1d(C -> 2C, kernel=K) as two fused MXU matmuls over the K*C
    # contraction dim, one per gate half (lane-aligned outputs, no 2C slice).
    vals = jnp.dot(wv_ref[...], xcat, preferred_element_type=jnp.float32)    # (C, T)
    gates = jnp.dot(wg_ref[...], xcat, preferred_element_type=jnp.float32)   # (C, T)

    # Conv bias is per output channel (rows).  Speaker bias reproduces the
    # PyTorch (B,C,T) + (B,1,C) broadcast with T == C: indexed by time
    # position (lanes), broadcast over channels (rows).
    vals = vals + bv_ref[...] + sb_ref[0]            # (C,1) and (1,T) broadcasts
    gates = gates + bg_ref[...]

    out = vals * jax.nn.sigmoid(gates) + x2d
    out_ref[0] = (out * jnp.float32(math.sqrt(0.5))).astype(out_ref.dtype)


def tts_conv(x_nct, speaker_embedding, conv_w, conv_b, fc_w, fc_b,
             causal_padding: bool = False):
    """x_nct: (B, C, T) f32; speaker_embedding: (B, 1, S) f32; conv_w: (2C, C, K)."""
    B, C, T = x_nct.shape
    O, C_in, K = conv_w.shape
    S = fc_w.shape[1]
    assert O == 2 * C and C_in == C
    # The PyTorch broadcast values(B,C,T) + speaker_bias(B,1,C) requires T == C.
    assert T == C, "TTSConv forward is only well-defined for T == conv_channels"

    pad_lo = (K - 1) if causal_padding else (K - 1) // 2

    # Split the conv weight into value/gate halves and fold the K taps into a
    # single (C, K*C) matrix so the kernel runs one matmul per half.
    # w[o, k*C + c] == conv_w[o, c, k]  (matches xcat row ordering).
    w_val = jnp.transpose(conv_w[:C], (0, 2, 1)).reshape(C, K * C)
    w_gate = jnp.transpose(conv_w[C:], (0, 2, 1)).reshape(C, K * C)
    b_val = conv_b[:C].reshape(C, 1)
    b_gate = conv_b[C:].reshape(C, 1)

    # Speaker block (Linear + Softsign): tiny ((B,S)@(S,C)) and grid-invariant,
    # computed once in the wrapper per the perf review and passed in.
    se = speaker_embedding.reshape(B, S)
    sb = se @ fc_w.T + fc_b
    sb = (sb / (1.0 + jnp.abs(sb))).reshape(B, 1, C).astype(jnp.float32)   # Softsign

    kernel = functools.partial(_tts_conv_kernel, K=K, pad_lo=pad_lo)

    return pl.pallas_call(
        kernel,
        out_shape=jax.ShapeDtypeStruct((B, C, T), jnp.float32),
        grid=(B,),
        in_specs=[
            pl.BlockSpec((1, C, T), lambda b: (b, 0, 0)),    # activations (per batch)
            pl.BlockSpec((C, K * C), lambda b: (0, 0)),      # value weights (resident)
            pl.BlockSpec((C, K * C), lambda b: (0, 0)),      # gate weights (resident)
            pl.BlockSpec((C, 1), lambda b: (0, 0)),          # value bias (resident)
            pl.BlockSpec((C, 1), lambda b: (0, 0)),          # gate bias (resident)
            pl.BlockSpec((1, 1, C), lambda b: (b, 0, 0)),    # speaker bias (per batch)
        ],
        out_specs=pl.BlockSpec((1, C, T), lambda b: (b, 0, 0)),
        scratch_shapes=[pltpu.VMEM((K * C, T), jnp.float32)],
        compiler_params=pltpu.CompilerParams(
            dimension_semantics=("parallel",),               # both v7x TensorCores
            vmem_limit_bytes=32 * 1024 * 1024),              # safe on v5e/v6e/v7x
    )(x_nct, w_val, w_gate, b_val, b_gate, sb)


def weight_norm_identity(w):
    # nn.utils.parametrizations.weight_norm: w = g * v / ||v|| (norm over all
    # dims except 0); g is initialised to ||v||, so at init this is an identity.
    flat = w.reshape(w.shape[0], -1)
    g = jnp.linalg.norm(flat, axis=1)
    norm = jnp.linalg.norm(flat, axis=1)
    return (g / norm).reshape((w.shape[0],) + (1,) * (w.ndim - 1)) * w


def reference(x, se, conv_w, conv_b, fc_w, fc_b, K, causal):
    C = x.shape[1]
    pad = (K - 1, 0) if causal else ((K - 1) // 2, (K - 1) // 2)
    conv = jax.lax.conv_general_dilated(
        x, conv_w, window_strides=(1,), padding=[pad],
        dimension_numbers=('NCH', 'OIH', 'NCH')) + conv_b[None, :, None]
    values, gates = conv[:, :C, :], conv[:, C:, :]
    sb = se @ fc_w.T + fc_b                    # (B, 1, C)
    sb = sb / (1.0 + jnp.abs(sb))              # Softsign
    out = (values + sb) * jax.nn.sigmoid(gates) + x
    return out * jnp.float32(math.sqrt(0.5))


if __name__ == "__main__":
    # T == conv_channels is required by the PyTorch broadcast in the forward.
    B, C, T, S, K = 2, 16, 16, 8, 5
    key = jax.random.PRNGKey(0)
    k1, k2, k3, k4, k5, k6 = jax.random.split(key, 6)

    x = jax.random.normal(k1, (B, C, T), jnp.float32)            # NCT input
    se = jax.random.normal(k2, (B, 1, S), jnp.float32)           # speaker embedding
    conv_w = 0.1 * jax.random.normal(k3, (2 * C, C, K), jnp.float32)
    conv_b = 0.1 * jax.random.normal(k4, (2 * C,), jnp.float32)
    fc_w = 0.1 * jax.random.normal(k5, (C, S), jnp.float32)
    fc_b = 0.1 * jax.random.normal(k6, (C,), jnp.float32)

    # weight_norm parametrization (identity at init, applied for faithfulness)
    conv_w = weight_norm_identity(conv_w)
    fc_w = weight_norm_identity(fc_w)

    for causal in (False, True):
        out = jax.block_until_ready(
            tts_conv(x, se, conv_w, conv_b, fc_w, fc_b, causal_padding=causal))
        ref = reference(x, se, conv_w, conv_b, fc_w, fc_b, K, causal)
        assert out.shape == (B, C, T) and out.dtype == jnp.float32
        err = float(jnp.max(jnp.abs(out - ref)))
        assert jnp.allclose(out, ref, atol=1e-5, rtol=1e-5), err

    print("KERNEL_OK")
</pallas_src>

<mosaic_0001>
module attributes {stable_mosaic.version = 11 : i64} {
  func.func @_tts_conv_kernel(%arg0: i32, %arg1: memref<1x16x16xf32, #tpu.memory_space<vmem>>, %arg2: memref<16x80xf32, #tpu.memory_space<vmem>>, %arg3: memref<16x80xf32, #tpu.memory_space<vmem>>, %arg4: memref<16x1xf32, #tpu.memory_space<vmem>>, %arg5: memref<16x1xf32, #tpu.memory_space<vmem>>, %arg6: memref<1x1x16xf32, #tpu.memory_space<vmem>>, %arg7: memref<1x16x16xf32, #tpu.memory_space<vmem>>, %arg8: memref<80x16xf32, #tpu.memory_space<vmem>>) attributes {dimension_semantics = [#tpu.dimension_semantics<parallel>], iteration_bounds = array<i64: 2>, scalar_prefetch = 0 : i64, scratch_operands = 1 : i64, tpu.core_type = #tpu.core_type<tc>, window_params = [{transform_indices = @transform_0, window_bounds = array<i64: 1, 16, 16>}, {pipeline_mode = #tpu.pipeline_mode<synchronous>, transform_indices = @transform_1, window_bounds = array<i64: 16, 80>}, {pipeline_mode = #tpu.pipeline_mode<synchronous>, transform_indices = @transform_2, window_bounds = array<i64: 16, 80>}, {pipeline_mode = #tpu.pipeline_mode<synchronous>, transform_indices = @transform_3, window_bounds = array<i64: 16, 1>}, {pipeline_mode = #tpu.pipeline_mode<synchronous>, transform_indices = @transform_4, window_bounds = array<i64: 16, 1>}, {transform_indices = @transform_5, window_bounds = array<i64: 1, 1, 16>}, {transform_indices = @transform_6, window_bounds = array<i64: 1, 16, 16>}]} {
    %c0 = arith.constant 0 : index
    %c0_0 = arith.constant 0 : index
    %c0_1 = arith.constant 0 : index
    %0 = vector.load %arg1[%c0, %c0_0, %c0_1] : memref<1x16x16xf32, #tpu.memory_space<vmem>>, vector<1x16x16xf32>
    %1 = vector.shape_cast %0 : vector<1x16x16xf32> to vector<16x16xf32>
    %cst = arith.constant 0.000000e+00 : f32
    %2 = vector.broadcast %cst : f32 to vector<80x16xf32>
    %c0_2 = arith.constant 0 : index
    %c0_3 = arith.constant 0 : index
    %3 = vector.load %arg8[%c0_2, %c0_3] : memref<80x16xf32, #tpu.memory_space<vmem>>, vector<80x16xf32>
    tpu.vector_store %arg8[%c0_2, %c0_3], %2 {strides = array<i32>} : memref<80x16xf32, #tpu.memory_space<vmem>>, vector<80x16xf32>,
    %4 = vector.extract_strided_slice %1 {offsets = [0, 0], sizes = [16, 14], strides = [1, 1]} : vector<16x16xf32> to vector<16x14xf32>
    %c0_4 = arith.constant 0 : index
    %c2 = arith.constant 2 : index
    %5 = vector.load %arg8[%c0_4, %c2] : memref<80x16xf32, #tpu.memory_space<vmem>>, vector<16x14xf32>
    tpu.vector_store %arg8[%c0_4, %c2], %4 {strides = array<i32>} : memref<80x16xf32, #tpu.memory_space<vmem>>, vector<16x14xf32>,
    %6 = vector.extract_strided_slice %1 {offsets = [0, 0], sizes = [16, 15], strides = [1, 1]} : vector<16x16xf32> to vector<16x15xf32>
    %c16 = arith.constant 16 : index
    %c1 = arith.constant 1 : index
    %7 = vector.load %arg8[%c16, %c1] : memref<80x16xf32, #tpu.memory_space<vmem>>, vector<16x15xf32>
    tpu.vector_store %arg8[%c16, %c1], %6 {strides = array<i32>} : memref<80x16xf32, #tpu.memory_space<vmem>>, vector<16x15xf32>,
    %c32 = arith.constant 32 : index
    %c0_5 = arith.constant 0 : index
    %8 = vector.load %arg8[%c32, %c0_5] : memref<80x16xf32, #tpu.memory_space<vmem>>, vector<16x16xf32>
    tpu.vector_store %arg8[%c32, %c0_5], %1 {strides = array<i32>} : memref<80x16xf32, #tpu.memory_space<vmem>>, vector<16x16xf32>,
    %9 = vector.extract_strided_slice %1 {offsets = [0, 1], sizes = [16, 15], strides = [1, 1]} : vector<16x16xf32> to vector<16x15xf32>
    %c48 = arith.constant 48 : index
    %c0_6 = arith.constant 0 : index
    %10 = vector.load %arg8[%c48, %c0_6] : memref<80x16xf32, #tpu.memory_space<vmem>>, vector<16x15xf32>
    tpu.vector_store %arg8[%c48, %c0_6], %9 {strides = array<i32>} : memref<80x16xf32, #tpu.memory_space<vmem>>, vector<16x15xf32>,
    %11 = vector.extract_strided_slice %1 {offsets = [0, 2], sizes = [16, 14], strides = [1, 1]} : vector<16x16xf32> to vector<16x14xf32>
    %c64 = arith.constant 64 : index
    %c0_7 = arith.constant 0 : index
    %12 = vector.load %arg8[%c64, %c0_7] : memref<80x16xf32, #tpu.memory_space<vmem>>, vector<16x14xf32>
    tpu.vector_store %arg8[%c64, %c0_7], %11 {strides = array<i32>} : memref<80x16xf32, #tpu.memory_space<vmem>>, vector<16x14xf32>,
    %c0_8 = arith.constant 0 : index
    %c0_9 = arith.constant 0 : index
    %13 = vector.load %arg8[%c0_8, %c0_9] : memref<80x16xf32, #tpu.memory_space<vmem>>, vector<80x16xf32>
    %c0_10 = arith.constant 0 : index
    %c0_11 = arith.constant 0 : index
    %14 = vector.load %arg2[%c0_10, %c0_11] : memref<16x80xf32, #tpu.memory_space<vmem>>, vector<16x80xf32>
    %cst_12 = arith.constant dense<0.000000e+00> : vector<16x16xf32>
    %15 = tpu.matmul %14, %13, %cst_12 {dimension_numbers = #tpu.dot_dimension_numbers<[1], [0], [0], [1], [0, 0, 1, 1], [], []>} : vector<16x80xf32>, vector<80x16xf32>, vector<16x16xf32> -> vector<16x16xf32>
    %c0_13 = arith.constant 0 : index
    %c0_14 = arith.constant 0 : index
    %16 = vector.load %arg3[%c0_13, %c0_14] : memref<16x80xf32, #tpu.memory_space<vmem>>, vector<16x80xf32>
    %cst_15 = arith.constant dense<0.000000e+00> : vector<16x16xf32>
    %17 = tpu.matmul %16, %13, %cst_15 {dimension_numbers = #tpu.dot_dimension_numbers<[1], [0], [0], [1], [0, 0, 1, 1], [], []>} : vector<16x80xf32>, vector<80x16xf32>, vector<16x16xf32> -> vector<16x16xf32>
    %c0_16 = arith.constant 0 : index
    %c0_17 = arith.constant 0 : index
    %18 = vector.load %arg4[%c0_16, %c0_17] : memref<16x1xf32, #tpu.memory_space<vmem>>, vector<16x1xf32>
    %19 = vector.broadcast %18 : vector<16x1xf32> to vector<16x16xf32>
    %20 = arith.addf %15, %19 : vector<16x16xf32>
    %c0_18 = arith.constant 0 : index
    %c0_19 = arith.constant 0 : index
    %c0_20 = arith.constant 0 : index
    %21 = vector.load %arg6[%c0_18, %c0_19, %c0_20] : memref<1x1x16xf32, #tpu.memory_space<vmem>>, vector<1x1x16xf32>
    %22 = vector.shape_cast %21 : vector<1x1x16xf32> to vector<1x16xf32>
    %23 = vector.broadcast %22 : vector<1x16xf32> to vector<16x16xf32>
    %24 = arith.addf %20, %23 : vector<16x16xf32>
    %c0_21 = arith.constant 0 : index
    %c0_22 = arith.constant 0 : index
    %25 = vector.load %arg5[%c0_21, %c0_22] : memref<16x1xf32, #tpu.memory_space<vmem>>, vector<16x1xf32>
    %26 = vector.broadcast %25 : vector<16x1xf32> to vector<16x16xf32>
    %27 = arith.addf %17, %26 : vector<16x16xf32>
    %28 = arith.negf %27 : vector<16x16xf32>
    %29 = math.exp %28 : vector<16x16xf32>
    %cst_23 = arith.constant 1.000000e+00 : f32
    %30 = vector.broadcast %cst_23 : f32 to vector<16x16xf32>
    %31 = arith.addf %30, %29 : vector<16x16xf32>
    %32 = arith.divf %30, %31 : vector<16x16xf32>
    %33 = arith.mulf %24, %32 : vector<16x16xf32>
    %34 = arith.addf %33, %1 : vector<16x16xf32>
    %cst_24 = arith.constant 0.707106769 : f32
    %35 = vector.broadcast %cst_24 : f32 to vector<16x16xf32>
    %36 = arith.mulf %34, %35 : vector<16x16xf32>
    %c0_25 = arith.constant 0 : index
    %c0_26 = arith.constant 0 : index
    %c0_27 = arith.constant 0 : index
    %37 = vector.load %arg7[%c0_25, %c0_26, %c0_27] : memref<1x16x16xf32, #tpu.memory_space<vmem>>, vector<1x16x16xf32>
    %38 = vector.shape_cast %37 : vector<1x16x16xf32> to vector<16x16xf32>
    %39 = vector.shape_cast %36 : vector<16x16xf32> to vector<1x16x16xf32>
    tpu.vector_store %arg7[%c0_25, %c0_26, %c0_27], %39 {strides = array<i32>} : memref<1x16x16xf32, #tpu.memory_space<vmem>>, vector<1x16x16xf32>,
    return
  }
  func.func @transform_0(%arg0: i32) -> (i32, i32, i32) {
    %c0_i32 = arith.constant 0 : i32
    %c0_i32_0 = arith.constant 0 : i32
    %c0_i32_1 = arith.constant 0 : i32
    return %arg0, %c0_i32, %c0_i32_0 : i32, i32, i32
  }
  func.func @transform_1(%arg0: i32) -> (i32, i32) {
    %c0_i32 = arith.constant 0 : i32
    %c0_i32_0 = arith.constant 0 : i32
    %c0_i32_1 = arith.constant 0 : i32
    return %c0_i32, %c0_i32_0 : i32, i32
  }
  func.func @transform_2(%arg0: i32) -> (i32, i32) {
    %c0_i32 = arith.constant 0 : i32
    %c0_i32_0 = arith.constant 0 : i32
    %c0_i32_1 = arith.constant 0 : i32
    return %c0_i32, %c0_i32_0 : i32, i32
  }
  func.func @transform_3(%arg0: i32) -> (i32, i32) {
    %c0_i32 = arith.constant 0 : i32
    %c0_i32_0 = arith.constant 0 : i32
    %c0_i32_1 = arith.constant 0 : i32
    return %c0_i32, %c0_i32_0 : i32, i32
  }
  func.func @transform_4(%arg0: i32) -> (i32, i32) {
    %c0_i32 = arith.constant 0 : i32
    %c0_i32_0 = arith.constant 0 : i32
    %c0_i32_1 = arith.constant 0 : i32
    return %c0_i32, %c0_i32_0 : i32, i32
  }
  func.func @transform_5(%arg0: i32) -> (i32, i32, i32) {
    %c0_i32 = arith.constant 0 : i32
    %c0_i32_0 = arith.constant 0 : i32
    %c0_i32_1 = arith.constant 0 : i32
    return %arg0, %c0_i32, %c0_i32_0 : i32, i32, i32
  }
  func.func @transform_6(%arg0: i32) -> (i32, i32, i32) {
    %c0_i32 = arith.constant 0 : i32
    %c0_i32_0 = arith.constant 0 : i32
    %c0_i32_1 = arith.constant 0 : i32
    return %arg0, %c0_i32, %c0_i32_0 : i32, i32, i32
  }
}

</mosaic_0001>

<llo_original>
// kernel: tpu_custom_call.1
$region0: #{tpu_custom_call.1}
  #allocation0 [shape = 'u32[]', space=smem, size = 0x4, offset = 0x4, fixed_abs, tag = 'smem constant byte address 0x4 - core index']
  #allocation1 [shape = 'u32[144,128]{1,0:T(1,128)}', space=vmem, size = 0x12000, scoped, tag = 'internal scratch']
  #allocation2 [shape = 'f32[80,16]{1,0:T(8,128)}', space=vmem, size = 0xa000, scoped, tag = 'scratch operand']
  %s0 = inlined_call_operand.vmem [shape: f32[2,16,16], index: 0, kind: input, shape index: {}]
  %s1 = inlined_call_operand.hbm [shape: f32[16,80], index: 1, kind: input, shape index: {}]
  %s2 = inlined_call_operand.hbm [shape: f32[16,80], index: 2, kind: input, shape index: {}]
  %s3 = inlined_call_operand.vmem [shape: f32[16,1], index: 3, kind: input, shape index: {}]
  %s4 = inlined_call_operand.vmem [shape: f32[16,1], index: 4, kind: input, shape index: {}]
  %s5 = inlined_call_operand.vmem [shape: f32[2,1,16], index: 5, kind: input, shape index: {}]
  %s6 = inlined_call_operand.hbm [shape: f32[2,16,16], index: 6, kind: output, shape index: {}]
  %s7 = sld [smem:[#allocation0]]
  $region65: #{tpu_custom_call.1} parent=0
    _
  %s9 = ssub.s32 1, %s7
  %s10 = scalar_select 0, %s9, %s7
  $region1: #{tpu_custom_call.1} parent=0
    #allocation3 [shape = 'u8[8192]{0}', space=vmem, size = 0x2000, scoped, tag = 'input window, operand 1, single buffered']
    #allocation4 [shape = 's32[2]{0}', space=sflag, size = 0x8, scoped, tag = 'scoped memory for tpu_custom_call.1']
    #allocation5 [shape = 's32[2]{0}', space=sflag, size = 0x8, scoped, tag = 'scoped memory for tpu_custom_call.1']
    #allocation6 [shape = 'u8[8192]{0}', space=vmem, size = 0x2000, scoped, tag = 'input window, operand 2, single buffered']
    #allocation7 [shape = 's32[1]{0}', space=sflag, size = 0x4, scoped, tag = 'scoped memory for tpu_custom_call.1']
    #allocation8 [shape = 'u8[16384]{0}', space=vmem, size = 0x4000, scoped, tag = 'output window, operand 0']
    %11 = vsyncpa [#allocation4], 0
    %12 = vsyncpa [#allocation7], 0
    %13 = vsyncpa [#allocation5], 0
    %s14 = scalar_lea.sflag [#allocation5], 1
    %15 = vsyncpa %s14, 0
    loop: start=0, step=1, limit=4
    $region2: #{tpu_custom_call.1} parent=1 // loop_pre_header
      _
    $region3: #{tpu_custom_call.1} parent=1 // loop_header
      %s17 = sphi 0, %s21
      %p18 = scmp.ge.s32.totalorder %s17, 4
      %s27 = sphi 0, %s29
      %s30 = sphi 0, %s27
      %s31 = sphi 0, %s30
      %s47 = sphi 0, %s31
      %s51 = sphi 0, %s51
      %s53 = sphi 0, %s51
      %s54 = sphi 0, %s53
      %s68 = sphi 0, %s54
      %s72 = sphi 0, %s72
      %s74 = sphi 0, %s72
      %s75 = sphi 0, %s74
      %s89 = sphi 0, %s75
      %s93 = sphi 0, %s93
      %s95 = sphi 0, %s93
      %s96 = sphi 0, %s95
      %s110 = sphi 0, %s96
      %s114 = sphi 0, %s114
      %s116 = sphi 0, %s114
      %s117 = sphi 0, %s116
      %s131 = sphi 0, %s117
      %s137 = sphi 0, %s139
      %s140 = sphi 0, %s137
      %s141 = sphi 0, %s140
      %s157 = sphi 0, %s141
      %s163 = sphi 0, %s165
      %s166 = sphi 0, %s163
      %s167 = sphi 0, %s166
      %s183 = sphi 0, %s167
    $region4: #{tpu_custom_call.1} parent=1 // loop_header_branch
      %20 = sbr.rel (%p18) target = $region8
    $region5: #{tpu_custom_call.1} parent=1 // loop_body
      %s22 = ssub.s32 %s17, 1
      %s23 = ssub.s32 %s17, 2
      %s24 = sadd.s32 %s17, 1
      %s25 = ssub.s32 %s17, %s24
      %p26 = scmp.eq.s32.totalorder %s25, 0
      %s28 = sadd.s32 %s27, 1
      %s29 = scalar_select %p26, %s27, %s28
      %p32 = pneg %p26
      %p33 = scmp.eq.s32.totalorder %s17, 1
      %p34 = por %p32, %p33
      %p35 = scmp.ne.s32.totalorder %s27, %s30
      %p36 = scmp.eq.s32.totalorder %s17, 0
      %p37 = por %p35, %p36
      %p38 = scmp.ne.s32.totalorder %s27, %s30
      %p39 = scmp.eq.s32.totalorder %s22, 1
      %p40 = por %p38, %p39
      %p41 = scmp.ne.s32.totalorder %s30, %s31
      %p42 = scmp.eq.s32.totalorder %s22, 0
      %p43 = por %p41, %p42
      %p44 = scmp.ne.s32.totalorder %s30, %s31
      %p45 = scmp.eq.s32.totalorder %s23, 1
      %p46 = por %p44, %p45
      %p48 = scmp.ne.s32.totalorder %s31, %s47
      %p49 = scmp.eq.s32.totalorder %s23, 0
      %p50 = por %p48, %p49
      %s52 = sadd.s32 %s51, 1
      %p55 = scmp.eq.s32.totalorder %s17, 1
      %p56 = scmp.ne.s32.totalorder %s51, %s53
      %p57 = scmp.eq.s32.totalorder %s17, 0
      %p58 = por %p56, %p57
      %p59 = scmp.ne.s32.totalorder %s51, %s53
      %p60 = scmp.eq.s32.totalorder %s22, 1
      %p61 = por %p59, %p60
      %p62 = scmp.ne.s32.totalorder %s53, %s54
      %p63 = scmp.eq.s32.totalorder %s22, 0
      %p64 = por %p62, %p63
      %p65 = scmp.ne.s32.totalorder %s53, %s54
      %p66 = scmp.eq.s32.totalorder %s23, 1
      %p67 = por %p65, %p66
      %p69 = scmp.ne.s32.totalorder %s54, %s68
      %p70 = scmp.eq.s32.totalorder %s23, 0
      %p71 = por %p69, %p70
      %s73 = sadd.s32 %s72, 1
      %p76 = scmp.eq.s32.totalorder %s17, 1
      %p77 = scmp.ne.s32.totalorder %s72, %s74
      %p78 = scmp.eq.s32.totalorder %s17, 0
      %p79 = por %p77, %p78
      %p80 = scmp.ne.s32.totalorder %s72, %s74
      %p81 = scmp.eq.s32.totalorder %s22, 1
      %p82 = por %p80, %p81
      %p83 = scmp.ne.s32.totalorder %s74, %s75
      %p84 = scmp.eq.s32.totalorder %s22, 0
      %p85 = por %p83, %p84
      %p86 = scmp.ne.s32.totalorder %s74, %s75
      %p87 = scmp.eq.s32.totalorder %s23, 1
      %p88 = por %p86, %p87
      %p90 = scmp.ne.s32.totalorder %s75, %s89
      %p91 = scmp.eq.s32.totalorder %s23, 0
      %p92 = por %p90, %p91
      %s94 = sadd.s32 %s93, 1
      %p97 = scmp.eq.s32.totalorder %s17, 1
      %p98 = scmp.ne.s32.totalorder %s93, %s95
      %p99 = scmp.eq.s32.totalorder %s17, 0
      %p100 = por %p98, %p99
      %p101 = scmp.ne.s32.totalorder %s93, %s95
      %p102 = scmp.eq.s32.totalorder %s22, 1
      %p103 = por %p101, %p102
      %p104 = scmp.ne.s32.totalorder %s95, %s96
      %p105 = scmp.eq.s32.totalorder %s22, 0
      %p106 = por %p104, %p105
      %p107 = scmp.ne.s32.totalorder %s95, %s96
      %p108 = scmp.eq.s32.totalorder %s23, 1
      %p109 = por %p107, %p108
      %p111 = scmp.ne.s32.totalorder %s96, %s110
      %p112 = scmp.eq.s32.totalorder %s23, 0
      %p113 = por %p111, %p112
      %s115 = sadd.s32 %s114, 1
      %p118 = scmp.eq.s32.totalorder %s17, 1
      %p119 = scmp.ne.s32.totalorder %s114, %s116
      %p120 = scmp.eq.s32.totalorder %s17, 0
      %p121 = por %p119, %p120
      %p122 = scmp.ne.s32.totalorder %s114, %s116
      %p123 = scmp.eq.s32.totalorder %s22, 1
      %p124 = por %p122, %p123
      %p125 = scmp.ne.s32.totalorder %s116, %s117
      %p126 = scmp.eq.s32.totalorder %s22, 0
      %p127 = por %p125, %p126
      %p128 = scmp.ne.s32.totalorder %s116, %s117
      %p129 = scmp.eq.s32.totalorder %s23, 1
      %p130 = por %p128, %p129
      %p132 = scmp.ne.s32.totalorder %s117, %s131
      %p133 = scmp.eq.s32.totalorder %s23, 0
      %p134 = por %p132, %p133
      %s135 = ssub.s32 %s17, %s24
      %p136 = scmp.eq.s32.totalorder %s135, 0
      %s138 = sadd.s32 %s137, 1
      %s139 = scalar_select %p136, %s137, %s138
      %p142 = pneg %p136
      %p143 = scmp.eq.s32.totalorder %s17, 1
      %p144 = por %p142, %p143
      %p145 = scmp.ne.s32.totalorder %s137, %s140
      %p146 = scmp.eq.s32.totalorder %s17, 0
      %p147 = por %p145, %p146
      %p148 = scmp.ne.s32.totalorder %s137, %s140
      %p149 = scmp.eq.s32.totalorder %s22, 1
      %p150 = por %p148, %p149
      %p151 = scmp.ne.s32.totalorder %s140, %s141
      %p152 = scmp.eq.s32.totalorder %s22, 0
      %p153 = por %p151, %p152
      %p154 = scmp.ne.s32.totalorder %s140, %s141
      %p155 = scmp.eq.s32.totalorder %s23, 1
      %p156 = por %p154, %p155
      %p158 = scmp.ne.s32.totalorder %s141, %s157
      %p159 = scmp.eq.s32.totalorder %s23, 0
      %p160 = por %p158, %p159
      %s161 = ssub.s32 %s17, %s24
      %p162 = scmp.eq.s32.totalorder %s161, 0
      %s164 = sadd.s32 %s163, 1
      %s165 = scalar_select %p162, %s163, %s164
      %p168 = pneg %p162
      %p169 = scmp.eq.s32.totalorder %s17, 1
      %p170 = por %p168, %p169
      %p171 = scmp.ne.s32.totalorder %s163, %s166
      %p172 = scmp.eq.s32.totalorder %s17, 0
      %p173 = por %p171, %p172
      %p174 = scmp.ne.s32.totalorder %s163, %s166
      %p175 = scmp.eq.s32.totalorder %s22, 1
      %p176 = por %p174, %p175
      %p177 = scmp.ne.s32.totalorder %s166, %s167
      %p178 = scmp.eq.s32.totalorder %s22, 0
      %p179 = por %p177, %p178
      %p180 = scmp.ne.s32.totalorder %s166, %s167
      %p181 = scmp.eq.s32.totalorder %s23, 1
      %p182 = por %p180, %p181
      %p184 = scmp.ne.s32.totalorder %s167, %s183
      %p185 = scmp.eq.s32.totalorder %s23, 0
      %p186 = por %p184, %p185
      %p187 = scmp.le.s32.totalorder 1, %s17
      %p188 = scmp.lt.s32.totalorder %s17, 3
      %p189 = pnand %p187, %p188
      %p190 = pneg %p189
      // Predicated region
      $region9: #{tpu_custom_call.1} parent=5 // pred_check
        _
      $region10: #{tpu_custom_call.1} parent=5 // pred_check_branch
        %192 = sbr.rel (%p189) target = $region12
      $region11: #{tpu_custom_call.1} parent=5 // pred_region
        %s193 = ssub.s32 %s17, 1
        // Predicated region
        $region13: #{tpu_custom_call.1} parent=11 // pred_check
          %p194 = pneg %p64
        $region14: #{tpu_custom_call.1} parent=11 // pred_check_branch
          %196 = sbr.rel (%p194) target = $region16
        $region15: #{tpu_custom_call.1} parent=11 // pred_region
          %s198 = ssub.s32 256, 256
          %199 = vsyncadd [#allocation4], %s198
          %s200 = sshll.u32 [#allocation3], 4
          %s201 = int_to_ptr.vmem [resolvable:$true] %s200
          %206 = dma.hbm_to_vmem [thread:$0]  %s1, 256, %s201, [#allocation4], 128, 128, 8
        $region16: #{tpu_custom_call.1} parent=11 // pred_fallthru
          _
        // Predicated region
        $region17: #{tpu_custom_call.1} parent=11 // pred_check
          %p207 = pneg %p85
        $region18: #{tpu_custom_call.1} parent=11 // pred_check_branch
          %209 = sbr.rel (%p207) target = $region20
        $region19: #{tpu_custom_call.1} parent=11 // pred_region
          %s211 = ssub.s32 256, 256
          %212 = vsyncadd [#allocation7], %s211
          %s213 = sshll.u32 [#allocation6], 4
          %s214 = int_to_ptr.vmem [resolvable:$true] %s213
          %219 = dma.hbm_to_vmem [thread:$0]  %s2, 256, %s214, [#allocation7], 128, 128, 8
        $region20: #{tpu_custom_call.1} parent=11 // pred_fallthru
          _
        // Predicated region
        $region21: #{tpu_custom_call.1} parent=11 // pred_check
          %p220 = pneg %p106
        $region22: #{tpu_custom_call.1} parent=11 // pred_check_branch
          %222 = sbr.rel (%p220) target = $region24
        $region23: #{tpu_custom_call.1} parent=11 // pred_region
          _
        $region24: #{tpu_custom_call.1} parent=11 // pred_fallthru
          _
        // Predicated region
        $region25: #{tpu_custom_call.1} parent=11 // pred_check
          %p223 = pneg %p127
        $region26: #{tpu_custom_call.1} parent=11 // pred_check_branch
          %225 = sbr.rel (%p223) target = $region28
        $region27: #{tpu_custom_call.1} parent=11 // pred_region
          _
        $region28: #{tpu_custom_call.1} parent=11 // pred_fallthru
          _
      $region12: #{tpu_custom_call.1} parent=5 // pred_fallthru
        _
      %p226 = scmp.lt.s32.totalorder %s17, 2
      // Predicated region
      $region29: #{tpu_custom_call.1} parent=5 // pred_check
        %p227 = pneg %p226
      $region30: #{tpu_custom_call.1} parent=5 // pred_check_branch
        %229 = sbr.rel (%p227) target = $region32
      $region31: #{tpu_custom_call.1} parent=5 // pred_region
        // Predicated region
        $region33: #{tpu_custom_call.1} parent=31 // pred_check
          %p230 = pneg %p37
        $region34: #{tpu_custom_call.1} parent=31 // pred_check_branch
          %232 = sbr.rel (%p230) target = $region36
        $region35: #{tpu_custom_call.1} parent=31 // pred_region
          %p233 = scmp.lt.s32.totalorder %s17, 1
          %s234 = scalar_select %p233, %s17, 1
          %s235 = smul.addr %s234, 2
          %s236 = smul.addr %s235, 8
          %s237 = scalar_lea.vmem %s0, %s236
        $region36: #{tpu_custom_call.1} parent=31 // pred_fallthru
          _
        // Predicated region
        $region37: #{tpu_custom_call.1} parent=31 // pred_check
          %p238 = pneg %p147
        $region38: #{tpu_custom_call.1} parent=31 // pred_check_branch
          %240 = sbr.rel (%p238) target = $region40
        $region39: #{tpu_custom_call.1} parent=31 // pred_region
          %p241 = scmp.lt.s32.totalorder %s17, 1
          %s242 = scalar_select %p241, %s17, 1
          %s243 = scalar_lea.vmem %s5, %s242
        $region40: #{tpu_custom_call.1} parent=31 // pred_fallthru
          _
      $region32: #{tpu_custom_call.1} parent=5 // pred_fallthru
        _
      %p244 = scmp.le.s32.totalorder 1, %s17
      %p245 = scmp.lt.s32.totalorder %s17, 3
      %p246 = pnand %p244, %p245
      %p247 = pneg %p246
      // Predicated region
      $region41: #{tpu_custom_call.1} parent=5 // pred_check
        _
      $region42: #{tpu_custom_call.1} parent=5 // pred_check_branch
        %249 = sbr.rel (%p246) target = $region44
      $region43: #{tpu_custom_call.1} parent=5 // pred_region
        %s250 = ssub.s32 %s17, 1
        // Predicated region
        $region45: #{tpu_custom_call.1} parent=43 // pred_check
          %p251 = pneg %p64
        $region46: #{tpu_custom_call.1} parent=43 // pred_check_branch
          %253 = sbr.rel (%p251) target = $region48
        $region47: #{tpu_custom_call.1} parent=43 // pred_region
          %254 = dma.done [#allocation4], 256
        $region48: #{tpu_custom_call.1} parent=43 // pred_fallthru
          _
        // Predicated region
        $region49: #{tpu_custom_call.1} parent=43 // pred_check
          %p255 = pneg %p85
        $region50: #{tpu_custom_call.1} parent=43 // pred_check_branch
          %257 = sbr.rel (%p255) target = $region52
        $region51: #{tpu_custom_call.1} parent=43 // pred_region
          %258 = dma.done [#allocation7], 256
        $region52: #{tpu_custom_call.1} parent=43 // pred_fallthru
          _
        %p259 = scmp.lt.s32.totalorder %s22, 1
        %s260 = scalar_select %p259, %s22, 1
        %s261 = smul.addr %s260, 2
        %s262 = smul.addr %s261, 8
        %s263 = scalar_lea.vmem %s0, %s262
        %p264 = pneg %p43
        %p265 = pneg %p40
        %p266 = pneg %p64
        %p267 = pneg %p61
        %p268 = pneg %p85
        %p269 = pneg %p82
        %p270 = pneg %p106
        %p271 = pneg %p103
        %p272 = pneg %p127
        %p273 = pneg %p124
        %p274 = scmp.lt.s32.totalorder %s22, 1
        %s275 = scalar_select %p274, %s22, 1
        %s276 = scalar_lea.vmem %s5, %s275
        %p277 = pneg %p153
        %p278 = pneg %p150
        %p279 = pneg %p179
        %p280 = pneg %p176
        %s281 = sand.u32 %s166, 1
        %s282 = scalar_lea.sflag [#allocation5], %s281
        %s283 = sand.u32 %s166, 1
        %s284 = smul.addr %s283, 16
        %s285 = scalar_lea.vmem [#allocation8], %s284
        %p286 = scmp.lt.s32.totalorder %s22, 1
        %s287 = scalar_select %p286, %s22, 1
        %s288 = smul.addr %s287, 2
        %s289 = smul.addr %s288, 8
        %s290 = scalar_lea.vmem %s0, %s289
        %p291 = scmp.lt.s32.totalorder %s22, 1
        %s292 = scalar_select %p291, %s22, 1
        %s293 = scalar_lea.vmem %s5, %s292
        %v294 = vld [vmem:[%s290] sm:$0xff]
        %v295 = vld [vmem:[%s290 + $0x8] sm:$0xff]
        %vm296 = vcmask 130048
        %297 = vst.msk [vmem:[#allocation2] sm:$0xff] %vm296, 0.0
        %298 = vst.msk [vmem:[#allocation2 + $0x8] sm:$0xff] %vm296, 0.0
        %299 = vst.msk [vmem:[#allocation2 + $0x10] sm:$0xff] %vm296, 0.0
        %300 = vst.msk [vmem:[#allocation2 + $0x18] sm:$0xff] %vm296, 0.0
        %301 = vst.msk [vmem:[#allocation2 + $0x20] sm:$0xff] %vm296, 0.0
        %302 = vst.msk [vmem:[#allocation2 + $0x28] sm:$0xff] %vm296, 0.0
        %303 = vst.msk [vmem:[#allocation2 + $0x30] sm:$0xff] %vm296, 0.0
        %304 = vst.msk [vmem:[#allocation2 + $0x38] sm:$0xff] %vm296, 0.0
        %305 = vst.msk [vmem:[#allocation2 + $0x40] sm:$0xff] %vm296, 0.0
        %306 = vst.msk [vmem:[#allocation2 + $0x48] sm:$0xff] %vm296, 0.0
        %309 = vrot.lane.b32.xlu0 %v294, 2
        %v310 = vpop.permute.xlu0 %309
        %311 = vrot.lane.b32.xlu0 %v295, 2
        %v312 = vpop.permute.xlu0 %311
        %vm315 = vcmask 130064
        %316 = vst.msk [vmem:[#allocation2] sm:$0xff] %vm315, %v310
        %317 = vst.msk [vmem:[#allocation2 + $0x8] sm:$0xff] %vm315, %v312
        %318 = vrot.lane.b32.xlu0 %v294, 1
        %v319 = vpop.permute.xlu0 %318
        %320 = vrot.lane.b32.xlu0 %v295, 1
        %v321 = vpop.permute.xlu0 %320
        %vm324 = vcmask 130056
        %325 = vst.msk [vmem:[#allocation2 + $0x10] sm:$0xff] %vm324, %v319
        %326 = vst.msk [vmem:[#allocation2 + $0x18] sm:$0xff] %vm324, %v321
        %327 = vst.msk [vmem:[#allocation2 + $0x20] sm:$0xff] %vm296, %v294
        %328 = vst.msk [vmem:[#allocation2 + $0x28] sm:$0xff] %vm296, %v295
        %329 = vrot.lane.b32.xlu0 %v294, 127
        %v330 = vpop.permute.xlu0 %329
        %331 = vrot.lane.b32.xlu0 %v295, 127
        %v332 = vpop.permute.xlu0 %331
        %vm335 = vcmask 121856
        %336 = vst.msk [vmem:[#allocation2 + $0x30] sm:$0xff] %vm335, %v330
        %337 = vst.msk [vmem:[#allocation2 + $0x38] sm:$0xff] %vm335, %v332
        %338 = vrot.lane.b32.xlu0 %v294, 126
        %v339 = vpop.permute.xlu0 %338
        %340 = vrot.lane.b32.xlu0 %v295, 126
        %v341 = vpop.permute.xlu0 %340
        %vm344 = vcmask 113664
        %345 = vst.msk [vmem:[#allocation2 + $0x40] sm:$0xff] %vm344, %v339
        %346 = vst.msk [vmem:[#allocation2 + $0x48] sm:$0xff] %vm344, %v341
        %v347 = vld [vmem:[#allocation2] sm:$0xff]
        %v348 = vld [vmem:[#allocation2 + $0x8] sm:$0xff]
        %v349 = vld [vmem:[#allocation2 + $0x10] sm:$0xff]
        %v350 = vld [vmem:[#allocation2 + $0x18] sm:$0xff]
        %v351 = vld [vmem:[#allocation2 + $0x20] sm:$0xff]
        %v352 = vld [vmem:[#allocation2 + $0x28] sm:$0xff]
        %v353 = vld [vmem:[#allocation2 + $0x30] sm:$0xff]
        %v354 = vld [vmem:[#allocation2 + $0x38] sm:$0xff]
        %v355 = vld [vmem:[#allocation2 + $0x40] sm:$0xff]
        %v356 = vld [vmem:[#allocation2 + $0x48] sm:$0xff]
        %v357 = vld [vmem:[#allocation3] sm:$0xff]
        %v358 = vld [vmem:[#allocation3 + $0x8] sm:$0xff]
        %v359 = vld [vmem:[#allocation6] sm:$0xff]
        %v360 = vld [vmem:[#allocation6 + $0x8] sm:$0xff]
        %v361 = vld [vmem:[%s3] sm:$0xff]
        %v362 = vld [vmem:[%s3 + $0x8] sm:$0xff]
        %364 = vset.pattern.permute.xlu0 0
        %365 = vperm.xlu0 %364, %v361
        %v366 = vpop.permute.xlu0 %365
        %369 = vset.pattern.permute.xlu0 0
        %370 = vperm.xlu0 %369, %v362
        %v371 = vpop.permute.xlu0 %370
        %vm373 = vcmask 654336
        %v375 = vsel %vm373, %v357, 0
        %v378 = vsel %vm373, %v358, 0
        %380 = vmatprep.subr.mxu0 0.0
        %381 = vmatpush1.msra.mxu0 %v347
        %382 = vmatprep.subr.mxu0 0.0
        %383 = vmatpush1.msra.mxu0 %v348
        %384 = vmatprep.subr.mxu0 0.0
        %385 = vmatpush1.msra.mxu0 %v349
        %386 = vmatprep.subr.mxu0 0.0
        %387 = vmatpush1.msra.mxu0 %v350
        %388 = vmatprep.subr.mxu0 0.0
        %389 = vmatpush1.msra.mxu0 %v351
        %390 = vmatprep.subr.mxu0 0.0
        %391 = vmatpush1.msra.mxu0 %v352
        %392 = vmatprep.subr.mxu0 0.0
        %393 = vmatpush1.msra.mxu0 %v353
        %394 = vmatprep.subr.mxu0 0.0
        %395 = vmatpush1.msra.mxu0 %v354
        %396 = vmatprep.subr.mxu0 0.0
        %397 = vmatpush1.msra.mxu0 %v355
        %398 = vmatprep.subr.mxu0 0.0
        %399 = vmatpush1.msra.mxu0 %v356
        %400 = vmatprep.subr.mxu0 0.0
        %401 = vmatpush1.msra.mxu0 0.0
        %402 = vmatprep.subr.mxu0 0.0
        %403 = vmatpush1.msra.mxu0 0.0
        %404 = vmatprep.subr.mxu0 0.0
        %405 = vmatpush1.msra.mxu0 0.0
        %406 = vmatprep.subr.mxu0 0.0
        %407 = vmatpush1.msra.mxu0 0.0
        %408 = vmatprep.subr.mxu0 0.0
        %409 = vmatpush1.msra.mxu0 0.0
        %410 = vmatprep.subr.mxu0 0.0
        %411 = vmatpush1.msra.mxu0 0.0
        %412 = vmatprep.subr.mxu0 0.0
        %413 = vmatpush1.msra.mxu0 0.0
        %414 = vmatprep.subr.mxu0 0.0
        %415 = vmatpush1.msra.mxu0 0.0
        %416 = vmatprep.subr.mxu0 0.0
        %417 = vmatpush1.msra.mxu0 0.0
        %418 = vmatprep.subr.mxu0 0.0
        %419 = vmatpush1.msra.mxu0 0.0
        %420 = vmatprep.subr.mxu0 0.0
        %421 = vmatpush1.msra.mxu0 0.0
        %422 = vmatprep.subr.mxu0 0.0
        %423 = vmatpush1.msra.mxu0 0.0
        %424 = vmatprep.subr.mxu0 0.0
        %425 = vmatpush1.msra.mxu0 0.0
        %426 = vmatprep.subr.mxu0 0.0
        %427 = vmatpush1.msra.mxu0 0.0
        %428 = vmatprep.subr.mxu0 0.0
        %429 = vmatpush1.msra.mxu0 0.0
        %430 = vmatprep.subr.mxu0 0.0
        %431 = vmatpush1.msra.mxu0 0.0
        %432 = vmatprep.subr.mxu0 0.0
        %433 = vmatpush1.msra.mxu0 0.0
        %434 = vmatprep.subr.mxu0 0.0
        %435 = vmatpush1.msra.mxu0 0.0
        %436 = vmatprep.subr.mxu0 0.0
        %437 = vmatpush1.msra.mxu0 0.0
        %438 = vmatprep.subr.mxu0 0.0
        %439 = vmatpush1.msra.mxu0 0.0
        %440 = vmatprep.subr.mxu0 0.0
        %441 = vmatpush1.msra.mxu0 0.0
        %442 = vmatprep.subr.mxu0 0.0
        %443 = vmatpush1.msra.mxu0 0.0
        %444 = vmatprep.mubr.f32.mxu0 0.0
        %445 = vmatmul.mubr.f32.gmra.mrb[0].mxu0 %v375
        %v446 = vpop.f32.mrb[0].mxu0
        %v447 = vadd.f32 %v366, %v446
        %v448 = vpop.f32.mrb[0].mxu0
        %449 = vmatprep.mubr.f32.mxu0 0.0
        %450 = vmatmul.mubr.f32.gmra.mrb[0].mxu0 %v378
        %v451 = vpop.f32.mrb[0].mxu0
        %v452 = vadd.f32 %v371, %v451
        %v453 = vpop.f32.mrb[0].mxu0
        %454 = vdwg.mxu0
        %v455 = vld [vmem:[%s293] sm:$0x1]
        %v457 = vlaneseq
        %v458 = vshrl.u32 %v457, 7
        %v459 = vsub.s32 0, %v458
        %v460 = vrot.slane %v455, %v459
        %v462 = vadd.f32 %v447, %v460
        %v463 = vadd.f32 %v452, %v460
        %v464 = vld [vmem:[%s4] sm:$0xff]
        %v465 = vld [vmem:[%s4 + $0x8] sm:$0xff]
        %467 = vset.pattern.permute.xlu0 0
        %468 = vperm.xlu0 %467, %v464
        %v469 = vpop.permute.xlu0 %468
        %472 = vset.pattern.permute.xlu0 0
        %473 = vperm.xlu0 %472, %v465
        %v474 = vpop.permute.xlu0 %473
        %v477 = vsel %vm373, %v359, 0
        %v480 = vsel %vm373, %v360, 0
        %482 = vmatprep.subr.mxu0 0.0
        %483 = vmatpush1.msra.mxu0 %v347
        %484 = vmatprep.subr.mxu0 0.0
        %485 = vmatpush1.msra.mxu0 %v348
        %486 = vmatprep.subr.mxu0 0.0
        %487 = vmatpush1.msra.mxu0 %v349
        %488 = vmatprep.subr.mxu0 0.0
        %489 = vmatpush1.msra.mxu0 %v350
        %490 = vmatprep.subr.mxu0 0.0
        %491 = vmatpush1.msra.mxu0 %v351
        %492 = vmatprep.subr.mxu0 0.0
        %493 = vmatpush1.msra.mxu0 %v352
        %494 = vmatprep.subr.mxu0 0.0
        %495 = vmatpush1.msra.mxu0 %v353
        %496 = vmatprep.subr.mxu0 0.0
        %497 = vmatpush1.msra.mxu0 %v354
        %498 = vmatprep.subr.mxu0 0.0
        %499 = vmatpush1.msra.mxu0 %v355
        %500 = vmatprep.subr.mxu0 0.0
        %501 = vmatpush1.msra.mxu0 %v356
        %502 = vmatprep.subr.mxu0 0.0
        %503 = vmatpush1.msra.mxu0 0.0
        %504 = vmatprep.subr.mxu0 0.0
        %505 = vmatpush1.msra.mxu0 0.0
        %506 = vmatprep.subr.mxu0 0.0
        %507 = vmatpush1.msra.mxu0 0.0
        %508 = vmatprep.subr.mxu0 0.0
        %509 = vmatpush1.msra.mxu0 0.0
        %510 = vmatprep.subr.mxu0 0.0
        %511 = vmatpush1.msra.mxu0 0.0
        %512 = vmatprep.subr.mxu0 0.0
        %513 = vmatpush1.msra.mxu0 0.0
        %514 = vmatprep.subr.mxu0 0.0
        %515 = vmatpush1.msra.mxu0 0.0
        %516 = vmatprep.subr.mxu0 0.0
        %517 = vmatpush1.msra.mxu0 0.0
        %518 = vmatprep.subr.mxu0 0.0
        %519 = vmatpush1.msra.mxu0 0.0
        %520 = vmatprep.subr.mxu0 0.0
        %521 = vmatpush1.msra.mxu0 0.0
        %522 = vmatprep.subr.mxu0 0.0
        %523 = vmatpush1.msra.mxu0 0.0
        %524 = vmatprep.subr.mxu0 0.0
        %525 = vmatpush1.msra.mxu0 0.0
        %526 = vmatprep.subr.mxu0 0.0
        %527 = vmatpush1.msra.mxu0 0.0
        %528 = vmatprep.subr.mxu0 0.0
        %529 = vmatpush1.msra.mxu0 0.0
        %530 = vmatprep.subr.mxu0 0.0
        %531 = vmatpush1.msra.mxu0 0.0
        %532 = vmatprep.subr.mxu0 0.0
        %533 = vmatpush1.msra.mxu0 0.0
        %534 = vmatprep.subr.mxu0 0.0
        %535 = vmatpush1.msra.mxu0 0.0
        %536 = vmatprep.subr.mxu0 0.0
        %537 = vmatpush1.msra.mxu0 0.0
        %538 = vmatprep.subr.mxu0 0.0
        %539 = vmatpush1.msra.mxu0 0.0
        %540 = vmatprep.subr.mxu0 0.0
        %541 = vmatpush1.msra.mxu0 0.0
        %542 = vmatprep.subr.mxu0 0.0
        %543 = vmatpush1.msra.mxu0 0.0
        %544 = vmatprep.subr.mxu0 0.0
        %545 = vmatpush1.msra.mxu0 0.0
        %546 = vmatprep.mubr.f32.mxu0 0.0
        %547 = vmatmul.mubr.f32.gmra.mrb[0].mxu0 %v477
        %v548 = vpop.f32.mrb[0].mxu0
        %v549 = vadd.f32 %v469, %v548
        %v550 = vpop.f32.mrb[0].mxu0
        %551 = vmatprep.mubr.f32.mxu0 0.0
        %552 = vmatmul.mubr.f32.gmra.mrb[0].mxu0 %v480
        %v553 = vpop.f32.mrb[0].mxu0
        %v554 = vadd.f32 %v474, %v553
        %v555 = vpop.f32.mrb[0].mxu0
        %556 = vdwg.mxu0
        %v557 = vxor.u32 %v549, 2147483648
        %v558 = vxor.u32 %v554, 2147483648
        %v559 = vmul.f32 %v557, 1.442695
        %v560 = vpow.pop %v559
        %v561 = vmul.f32 %v558, 1.442695
        %v562 = vpow.pop %v561
        %v563 = vadd.f32 %v560, 1.0
        %v564 = vadd.f32 %v562, 1.0
        %v565 = vrcp.pop %v563
        %v566 = vmul.f32 1.0, %v565
        %v567 = vrcp.pop %v564
        %v568 = vmul.f32 1.0, %v567
        %v569 = vmul.f32 %v462, %v566
        %v570 = vmul.f32 %v463, %v568
        %v571 = vadd.f32 %v569, %v294
        %v572 = vadd.f32 %v570, %v295
        %v573 = vmul.f32 %v571, 0.70710677
        %v574 = vmul.f32 %v572, 0.70710677
        %575 = vst.msk [vmem:[%s285] sm:$0xff] %vm296, %v573
        %576 = vst.msk [vmem:[%s285 + $0x8] sm:$0xff] %vm296, %v574
        %s577 = sand.u32 %s166, 1
        %s578 = scalar_lea.sflag [#allocation5], %s577
        %s579 = sand.u32 %s166, 1
        %s580 = smul.addr %s579, 16
        %s581 = scalar_lea.vmem [#allocation8], %s580
        // Predicated region
        $region53: #{tpu_custom_call.1} parent=43 // pred_check
          %p582 = pneg %p176
        $region54: #{tpu_custom_call.1} parent=43 // pred_check_branch
          %584 = sbr.rel (%p582) target = $region56
        $region55: #{tpu_custom_call.1} parent=43 // pred_region
          %s586 = ssub.s32 256, 256
          %587 = vsyncadd %s578, %s586
          %s588 = smul.addr %s22, 2
          %s589 = smul.addr %s588, 128
          %s590 = scalar_lea.hbm %s6, %s589
          %s591 = sshll.u32 %s581, 4
          %s592 = int_to_ptr.vmem [resolvable:$true] %s591
          %597 = dma.vmem_to_hbm [thread:$0]  %s592, 256, %s590, %s578, 128, 128, 8
        $region56: #{tpu_custom_call.1} parent=43 // pred_fallthru
          _
      $region44: #{tpu_custom_call.1} parent=5 // pred_fallthru
        _
      %p598 = scmp.le.s32.totalorder 2, %s17
      // Predicated region
      $region57: #{tpu_custom_call.1} parent=5 // pred_check
        %p599 = pneg %p598
      $region58: #{tpu_custom_call.1} parent=5 // pred_check_branch
        %601 = sbr.rel (%p599) target = $region60
      $region59: #{tpu_custom_call.1} parent=5 // pred_region
        %s602 = ssub.s32 %s17, 2
        // Predicated region
        $region61: #{tpu_custom_call.1} parent=59 // pred_check
          %p603 = pneg %p182
        $region62: #{tpu_custom_call.1} parent=59 // pred_check_branch
          %605 = sbr.rel (%p603) target = $region64
        $region63: #{tpu_custom_call.1} parent=59 // pred_region
          %s606 = sand.u32 %s167, 1
          %s607 = scalar_lea.sflag [#allocation5], %s606
          %s608 = sand.u32 %s167, 1
          %s609 = smul.addr %s608, 16
          %s610 = scalar_lea.vmem [#allocation8], %s609
          %611 = dma.done %s607, 256
        $region64: #{tpu_custom_call.1} parent=59 // pred_fallthru
          _
      $region60: #{tpu_custom_call.1} parent=5 // pred_fallthru
        _
    $region6: #{tpu_custom_call.1} parent=1 // loop_footer
      %s21 = sadd.s32 1, %s17
    $region7: #{tpu_custom_call.1} parent=1 // loop_footer_branch
      %16 = sbr.rel target = $region3
    $region8: #{tpu_custom_call.1} parent=1 // loop_exit
      _
    %612 = vsyncpa [#allocation4], 1
    %s613 = scalar_lea.sflag [#allocation4], 1
    %614 = vsyncpa %s613, 1
    %615 = vsyncpa [#allocation7], 1
    %616 = vsyncpa [#allocation5], 1
    %s617 = scalar_lea.sflag [#allocation5], 1
    %618 = vsyncpa %s617, 1

</llo_original>
